<compile_context>
chip_gen: v7x
topology: tpu7x:2x2x1
jax: 0.10.0
libtpu: 0.0.40
codegen_flags: <defaults>
</compile_context>

<pallas_src>
import jax
import jax.numpy as jnp
from jax.experimental import pallas as pl
from jax.experimental.pallas import tpu as pltpu

GAMMA = 2.0  # FocalLoss default


def _round_up(x: int, m: int) -> int:
    return (x + m - 1) // m * m


def _make_kernel(n_rows: int, tile_n: int, tiles_per_part: int):
    def kernel(logits_ref, target_ref, out_ref):
        p_idx = pl.program_id(0)   # partition (TensorCore split on v7x)
        t_idx = pl.program_id(1)   # sequential reduction over row tiles

        # Init the per-partition accumulator (output block resident across t).
        @pl.when(t_idx == 0)
        def _():
            out_ref[...] = jnp.zeros_like(out_ref)

        x = logits_ref[...]                      # (tile_n, C), native dtype (f32/bf16)
        tgt = target_ref[...]                    # (tile_n, 1) int32

        # Numerically stable per-row CE with the max folded away:
        #   ce = log(sum(exp(x - m))) - (x - m)[target]
        m = jnp.max(x, axis=-1, keepdims=True)                      # (tile_n, 1)
        sh = x - m                                                  # <= 0, native dtype

        sumexp = jnp.sum(jnp.exp(sh.astype(jnp.float32)),
                         axis=-1, keepdims=True)                    # (tile_n, 1) f32

        # Target-class pick via one-hot mask on the same shifted tile
        # (exactly one non-zero per row, so a native-dtype sum is exact).
        col = jax.lax.broadcasted_iota(jnp.int32, x.shape, 1)       # (tile_n, C)
        picked = jnp.sum(jnp.where(col == tgt, sh, jnp.zeros_like(sh)),
                         axis=-1, keepdims=True).astype(jnp.float32)

        ce = jnp.log(sumexp) - picked                               # per-sample NLL

        # Mask rows beyond the true batch size (ragged last tile and the
        # clamped overshoot tiles of the second partition read padding/stale
        # data; per-row reductions above make this safe).
        row0 = (p_idx * tiles_per_part + t_idx) * tile_n
        row = jax.lax.broadcasted_iota(jnp.int32, (tile_n, 1), 0) + row0
        ce = jnp.where(row < n_rows, ce, 0.0)

        out_ref[...] += jnp.sum(ce, axis=0, keepdims=True).reshape(1, 1, 1)

    return kernel


def focal_loss(logits: jax.Array, target: jax.Array) -> jax.Array:
    """logits: (N, C) float (f32 or bf16), target: (N,) int. Returns scalar f32 loss."""
    n, c = logits.shape
    target2d = target.astype(jnp.int32).reshape(n, 1)
    itemsize = jnp.dtype(logits.dtype).itemsize

    # Sublane packing alignment: 8 rows for f32, 16 for bf16, 32 for int8.
    row_align = max(8, 32 // itemsize)

    # Tile sizing from a VMEM byte budget (no arbitrary row cap).  Each buffered
    # row costs: logits row (C * itemsize) + the (tile_n, 1) int32 target block,
    # which is lane-padded to 128 in VMEM (128 * 4 bytes/row).  ~8 MiB/buffer,
    # double-buffered -> ~16 MiB total, under the 32 MiB scoped limit below on
    # v5e / v6e / v7x.
    per_buffer_budget = 8 * 1024 * 1024
    row_bytes = c * itemsize + 128 * 4
    tile_n = per_buffer_budget // row_bytes
    tile_n = max(row_align, (tile_n // row_align) * row_align)
    tile_n = min(tile_n, _round_up(n, row_align))   # don't exceed the padded problem

    num_tiles = pl.cdiv(n, tile_n)

    # Always split the reduction across two partitions when there is more than
    # one tile; the ragged partition is handled by index clamping + row mask.
    # (No-op on single-TensorCore v5e/v6e; lets v7x's two TCs each take half.)
    n_parts = 2 if num_tiles >= 2 else 1
    tiles_per_part = pl.cdiv(num_tiles, n_parts)
    last_block = num_tiles - 1

    kernel = _make_kernel(n, tile_n, tiles_per_part)

    def in_map(p, t):
        # Clamp overshoot tiles of the ragged partition to a valid block; the
        # kernel masks their rows to zero via the unclamped row offset.
        return (jnp.minimum(p * tiles_per_part + t, last_block), 0)

    cost = pl.CostEstimate(
        flops=6 * n * c,
        transcendentals=n * c,
        bytes_accessed=n * c * itemsize + n * 4 + n_parts * 4,
    )

    partials = pl.pallas_call(
        kernel,
        out_shape=jax.ShapeDtypeStruct((n_parts, 1, 1), jnp.float32),
        grid=(n_parts, tiles_per_part),
        in_specs=[
            pl.BlockSpec((tile_n, c), in_map),
            pl.BlockSpec((tile_n, 1), in_map),
        ],
        out_specs=pl.BlockSpec((1, 1, 1), lambda p, t: (p, 0, 0)),
        compiler_params=pltpu.CompilerParams(
            dimension_semantics=("parallel", "arbitrary"),
            vmem_limit_bytes=32 * 1024 * 1024,
        ),
        cost_estimate=cost,
    )(logits, target2d)

    # reduction='mean' cross entropy on the scalar, then focal modulation.
    logp = jnp.sum(partials) / jnp.float32(n)
    p = jnp.exp(-logp)
    omp = 1.0 - p
    return omp * omp * logp   # gamma = 2 -> explicit square instead of pow


def _reference(logits, target):
    lse = jax.nn.logsumexp(logits.astype(jnp.float32), axis=-1)
    nll = lse - logits.astype(jnp.float32)[jnp.arange(logits.shape[0]), target]
    logp = jnp.mean(nll)
    p = jnp.exp(-logp)
    return (1.0 - p) ** 2 * logp


if __name__ == "__main__":
    key = jax.random.PRNGKey(0)
    k1, k2, k3, k4 = jax.random.split(key, 4)

    # Small shapes consistent with the module: batch=8, classes=32.
    N, C = 8, 32
    logits = jax.random.normal(k1, (N, C), dtype=jnp.float32)
    target = jax.random.randint(k2, (N,), 0, C, dtype=jnp.int32)

    loss = focal_loss(logits, target)
    jax.block_until_ready(loss)
    ref = _reference(logits, target)
    assert jnp.allclose(loss, ref, rtol=1e-5, atol=1e-6), (loss, ref)

    # Ragged batch (not a multiple of the sublane alignment) to exercise the
    # in-kernel row masking path.
    N2 = 13
    logits2 = jax.random.normal(k3, (N2, C), dtype=jnp.float32)
    target2 = jax.random.randint(k4, (N2,), 0, C, dtype=jnp.int32)
    loss2 = focal_loss(logits2, target2)
    jax.block_until_ready(loss2)
    ref2 = _reference(logits2, target2)
    assert jnp.allclose(loss2, ref2, rtol=1e-5, atol=1e-6), (loss2, ref2)

    print("KERNEL_OK")
</pallas_src>

<mosaic_0001>
module attributes {stable_mosaic.version = 11 : i64} {
  func.func @kernel(%arg0: i32, %arg1: i32, %arg2: memref<8x32xf32, #tpu.memory_space<vmem>>, %arg3: memref<8x1xi32, #tpu.memory_space<vmem>>, %arg4: memref<1x1x1xf32, #tpu.memory_space<vmem>>) attributes {dimension_semantics = [#tpu.dimension_semantics<parallel>, #tpu.dimension_semantics<arbitrary>], iteration_bounds = array<i64: 1, 1>, scalar_prefetch = 0 : i64, scratch_operands = 0 : i64, tpu.core_type = #tpu.core_type<tc>, window_params = [{transform_indices = @transform_0, window_bounds = array<i64: 8, 32>}, {transform_indices = @transform_1, window_bounds = array<i64: 8, 1>}, {transform_indices = @transform_2, window_bounds = array<i64: 1, 1, 1>}]} {
    %c0_i32 = arith.constant 0 : i32
    %0 = arith.cmpi eq, %arg1, %c0_i32 : i32
    %1 = arith.extui %0 : i1 to i32
    %c0_i32_0 = arith.constant 0 : i32
    %2 = arith.cmpi ne, %1, %c0_i32_0 : i32
    scf.if %2 {
      %cst_16 = arith.constant 0.000000e+00 : f32
      %37 = vector.broadcast %cst_16 : f32 to vector<1x1x1xf32>
      %c0_17 = arith.constant 0 : index
      %c0_18 = arith.constant 0 : index
      %c0_19 = arith.constant 0 : index
      %38 = vector.load %arg4[%c0_17, %c0_18, %c0_19] : memref<1x1x1xf32, #tpu.memory_space<vmem>>, vector<1x1x1xf32>
      tpu.vector_store %arg4[%c0_17, %c0_18, %c0_19], %37 {strides = array<i32>} : memref<1x1x1xf32, #tpu.memory_space<vmem>>, vector<1x1x1xf32>,
    } else {
    }
    %c0 = arith.constant 0 : index
    %c0_1 = arith.constant 0 : index
    %3 = vector.load %arg2[%c0, %c0_1] : memref<8x32xf32, #tpu.memory_space<vmem>>, vector<8x32xf32>
    %c0_2 = arith.constant 0 : index
    %c0_3 = arith.constant 0 : index
    %4 = vector.load %arg3[%c0_2, %c0_3] : memref<8x1xi32, #tpu.memory_space<vmem>>, vector<8x1xi32>
    %cst = arith.constant dense<0xFF800000> : vector<8xf32>
    %5 = vector.multi_reduction <maximumf>, %3, %cst [1] : vector<8x32xf32> to vector<8xf32>
    %6 = vector.shape_cast %5 : vector<8xf32> to vector<8x1xf32>
    %7 = vector.broadcast %6 : vector<8x1xf32> to vector<8x32xf32>
    %8 = arith.subf %3, %7 : vector<8x32xf32>
    %9 = math.exp %8 : vector<8x32xf32>
    %cst_4 = arith.constant dense<0.000000e+00> : vector<8xf32>
    %10 = vector.multi_reduction <add>, %9, %cst_4 [1] : vector<8x32xf32> to vector<8xf32>
    %11 = vector.shape_cast %10 : vector<8xf32> to vector<8x1xf32>
    %12 = tpu.iota {dimensions = array<i32: 1>} : vector<8x32xi32>
    %13 = vector.broadcast %4 : vector<8x1xi32> to vector<8x32xi32>
    %14 = arith.cmpi eq, %12, %13 : vector<8x32xi32>
    %cst_5 = arith.constant 0.000000e+00 : f32
    %15 = vector.broadcast %cst_5 : f32 to vector<8x32xf32>
    %16 = arith.select %14, %8, %15 : vector<8x32xi1>, vector<8x32xf32>
    %cst_6 = arith.constant dense<0.000000e+00> : vector<8xf32>
    %17 = vector.multi_reduction <add>, %16, %cst_6 [1] : vector<8x32xf32> to vector<8xf32>
    %18 = vector.shape_cast %17 : vector<8xf32> to vector<8x1xf32>
    %19 = math.log %11 : vector<8x1xf32>
    %20 = arith.subf %19, %18 : vector<8x1xf32>
    %c1_i32 = arith.constant 1 : i32
    %21 = arith.muli %arg0, %c1_i32 : i32
    %22 = arith.addi %21, %arg1 : i32
    %c8_i32 = arith.constant 8 : i32
    %23 = arith.muli %22, %c8_i32 : i32
    %24 = tpu.iota {dimensions = array<i32: 0>} : vector<8x1xi32>
    %25 = vector.broadcast %23 : i32 to vector<8x1xi32>
    %26 = arith.addi %24, %25 : vector<8x1xi32>
    %c8_i32_7 = arith.constant 8 : i32
    %27 = vector.broadcast %c8_i32_7 : i32 to vector<8x1xi32>
    %28 = arith.cmpi slt, %26, %27 : vector<8x1xi32>
    %cst_8 = arith.constant 0.000000e+00 : f32
    %29 = vector.broadcast %cst_8 : f32 to vector<8x1xf32>
    %30 = arith.select %28, %20, %29 : vector<8x1xi1>, vector<8x1xf32>
    %c0_9 = arith.constant 0 : index
    %c0_10 = arith.constant 0 : index
    %c0_11 = arith.constant 0 : index
    %31 = vector.load %arg4[%c0_9, %c0_10, %c0_11] : memref<1x1x1xf32, #tpu.memory_space<vmem>>, vector<1x1x1xf32>
    %cst_12 = arith.constant dense<0.000000e+00> : vector<1xf32>
    %32 = vector.multi_reduction <add>, %30, %cst_12 [0] : vector<8x1xf32> to vector<1xf32>
    %33 = vector.shape_cast %32 : vector<1xf32> to vector<1x1xf32>
    %34 = vector.shape_cast %33 : vector<1x1xf32> to vector<1x1x1xf32>
    %35 = arith.addf %31, %34 : vector<1x1x1xf32>
    %c0_13 = arith.constant 0 : index
    %c0_14 = arith.constant 0 : index
    %c0_15 = arith.constant 0 : index
    %36 = vector.load %arg4[%c0_13, %c0_14, %c0_15] : memref<1x1x1xf32, #tpu.memory_space<vmem>>, vector<1x1x1xf32>
    tpu.vector_store %arg4[%c0_13, %c0_14, %c0_15], %35 {strides = array<i32>} : memref<1x1x1xf32, #tpu.memory_space<vmem>>, vector<1x1x1xf32>,
    return
  }
  func.func @transform_0(%arg0: i32, %arg1: i32) -> (i32, i32) {
    %c1_i32 = arith.constant 1 : i32
    %0 = arith.muli %arg0, %c1_i32 : i32
    %1 = arith.addi %0, %arg1 : i32
    %c0_i32 = arith.constant 0 : i32
    %2 = arith.minsi %1, %c0_i32 : i32
    %c0_i32_0 = arith.constant 0 : i32
    %c0_i32_1 = arith.constant 0 : i32
    return %2, %c0_i32_0 : i32, i32
  }
  func.func @transform_1(%arg0: i32, %arg1: i32) -> (i32, i32) {
    %c1_i32 = arith.constant 1 : i32
    %0 = arith.muli %arg0, %c1_i32 : i32
    %1 = arith.addi %0, %arg1 : i32
    %c0_i32 = arith.constant 0 : i32
    %2 = arith.minsi %1, %c0_i32 : i32
    %c0_i32_0 = arith.constant 0 : i32
    %c0_i32_1 = arith.constant 0 : i32
    return %2, %c0_i32_0 : i32, i32
  }
  func.func @transform_2(%arg0: i32, %arg1: i32) -> (i32, i32, i32) {
    %c0_i32 = arith.constant 0 : i32
    %c0_i32_0 = arith.constant 0 : i32
    %c0_i32_1 = arith.constant 0 : i32
    return %arg0, %c0_i32, %c0_i32_0 : i32, i32, i32
  }
}

</mosaic_0001>

<llo_original>
// kernel: tpu_custom_call.1
$region0: #{tpu_custom_call.1}
  #allocation0 [shape = 'u32[]', space=smem, size = 0x4, offset = 0x4, fixed_abs, tag = 'smem constant byte address 0x4 - core index']
  #allocation1 [shape = 'u32[144,128]{1,0:T(1,128)}', space=vmem, size = 0x12000, scoped, tag = 'internal scratch']
  %s0 = inlined_call_operand.vmem [shape: f32[8,32], index: 0, kind: input, shape index: {}]
  %s1 = inlined_call_operand.vmem [shape: s32[8,1], index: 1, kind: input, shape index: {}]
  %s2 = inlined_call_operand.hbm [shape: f32[1,1,1], index: 2, kind: output, shape index: {}]
  %s3 = sld [smem:[#allocation0]]
  $region22: #{tpu_custom_call.1} parent=0
    _
  %s5 = ssub.s32 1, %s3
  %s6 = scalar_select 0, %s5, %s3
  $region1: #{tpu_custom_call.1} parent=0
    #allocation2 [shape = 'u8[512]{0}', space=vmem, size = 0x400, scoped, tag = 'output window, operand 0, single buffered']
    #allocation3 [shape = 's32[1]{0}', space=sflag, size = 0x4, scoped, tag = 'scoped memory for tpu_custom_call.1']
    %7 = vsyncpa [#allocation3], 0
    // Predicated region
    $region2: #{tpu_custom_call.1} parent=1 // pred_check
      _
    $region3: #{tpu_custom_call.1} parent=1 // pred_check_branch
      %9 = sbr.rel (0) target = $region5
    $region4: #{tpu_custom_call.1} parent=1 // pred_region
      %s10 = sadd.s32 0, 0
      %p11 = scmp.lt.s32.totalorder %s10, 0
      %s12 = scalar_select %p11, %s10, 0
      %p13 = scmp.lt.s32.totalorder %s12, 0
      %s14 = scalar_select %p13, %s12, 0
      %s15 = smul.addr %s14, 8
      %s16 = scalar_lea.vmem %s0, %s15
      %s17 = sadd.s32 0, 0
      %p18 = scmp.lt.s32.totalorder %s17, 0
      %s19 = scalar_select %p18, %s17, 0
    $region5: #{tpu_custom_call.1} parent=1 // pred_fallthru
      _
    // Predicated region
    $region6: #{tpu_custom_call.1} parent=1 // pred_check
      _
    $region7: #{tpu_custom_call.1} parent=1 // pred_check_branch
      %21 = sbr.rel (0) target = $region9
    $region8: #{tpu_custom_call.1} parent=1 // pred_region
      %s22 = sadd.s32 0, 0
      %p23 = scmp.lt.s32.totalorder %s22, 0
      %s24 = scalar_select %p23, %s22, 0
      %p25 = scmp.lt.s32.totalorder %s24, 0
      %s26 = scalar_select %p25, %s24, 0
      %s27 = smul.addr %s26, 8
      %s28 = scalar_lea.vmem %s1, %s27
      %s29 = sadd.s32 0, 0
      %p30 = scmp.lt.s32.totalorder %s29, 0
      %s31 = scalar_select %p30, %s29, 0
    $region9: #{tpu_custom_call.1} parent=1 // pred_fallthru
      _
    %s32 = sadd.s32 0, 0
    %p33 = scmp.lt.s32.totalorder %s32, 0
    %s34 = scalar_select %p33, %s32, 0
    %p35 = scmp.lt.s32.totalorder %s34, 0
    %s36 = scalar_select %p35, %s34, 0
    %s37 = smul.addr %s36, 8
    %s38 = scalar_lea.vmem %s0, %s37
    %s39 = sadd.s32 0, 0
    %p40 = scmp.lt.s32.totalorder %s39, 0
    %s41 = scalar_select %p40, %s39, 0
    %p42 = scmp.lt.s32.totalorder %s41, 0
    %s43 = scalar_select %p42, %s41, 0
    %s44 = smul.addr %s43, 8
    %s45 = scalar_lea.vmem %s1, %s44
    %s46 = sadd.s32 0, 0
    %p47 = scmp.lt.s32.totalorder %s46, 0
    %s48 = scalar_select %p47, %s46, 0
    %p49 = scmp.lt.s32.totalorder %s48, 0
    %s50 = scalar_select %p49, %s48, 0
    %s51 = smul.addr %s50, 8
    %s52 = scalar_lea.vmem %s0, %s51
    %s53 = sadd.s32 0, 0
    %p54 = scmp.lt.s32.totalorder %s53, 0
    %s55 = scalar_select %p54, %s53, 0
    %s56 = sadd.s32 0, 0
    %p57 = scmp.lt.s32.totalorder %s56, 0
    %s58 = scalar_select %p57, %s56, 0
    %p59 = scmp.lt.s32.totalorder %s58, 0
    %s60 = scalar_select %p59, %s58, 0
    %s61 = smul.addr %s60, 8
    %s62 = scalar_lea.vmem %s1, %s61
    %s63 = sadd.s32 0, 0
    %p64 = scmp.lt.s32.totalorder %s63, 0
    %s65 = scalar_select %p64, %s63, 0
    %p66 = scmp.eq.s32.totalorder 0, 0
    // Predicated region
    $region10: #{tpu_custom_call.1} parent=1 // pred_check
      %p67 = pneg %p66
    $region11: #{tpu_custom_call.1} parent=1 // pred_check_branch
      %69 = sbr.rel (%p67) target = $region13
    $region12: #{tpu_custom_call.1} parent=1 // pred_region
      %vm70 = vcmask 0
      %71 = vst.msk [vmem:[#allocation2] sm:$0x1] %vm70, 0.0
    $region13: #{tpu_custom_call.1} parent=1 // pred_fallthru
      _
    %v72 = vld [vmem:[%s52] sm:$0xff]
    %v73 = vld [vmem:[%s62] sm:$0xff]
    %vm74 = vcmask 261120
    %v75 = vsel %vm74, %v72, -inf
    %76 = vmax.xlane.f32.xlu0 %v75
    %v77 = vpop.xlane.xlu0 %76
    %v78 = vsub.f32 %v72, %v77
    %v79 = vmul.f32 %v78, 1.442695
    %v80 = vpow.pop %v79
    %v81 = vsel %vm74, %v80, 0.0
    %82 = vadd.xlane.f32.xlu0 %v81
    %v83 = vpop.xlane.xlu0 %82
    %v84 = vlaneseq
    %v85 = vand.u32 %v84, 127
    %86 = vset.pattern.permute.xlu0 0
    %87 = vperm.xlu0 %86, %v73
    %v88 = vpop.permute.xlu0 %87
    %vm89 = vcmp.eq.s32.totalorder %v85, %v88
    %v90 = vsel %vm89, %v78, 0.0
    %v91 = vsel %vm74, %v90, 0.0
    %92 = vadd.xlane.f32.xlu0 %v91
    %v93 = vpop.xlane.xlu0 %92
    %v94 = vlog2.pop %v83
    %v95 = vmul.f32 %v94, 0.6931472
    %v96 = vsub.f32 %v95, %v93
    %s97 = sadd.s32 0, 0
    %s98 = smul.u32 %s97, 8
    %v99 = vlaneseq
    %v100 = vshrl.u32 %v99, 7
    %v101 = vstv %s98
    %v102 = vadd.s32 %v100, %v101
    %vm103 = vcmp.lt.s32.totalorder %v102, 8
    %v104 = vsel %vm103, %v96, 0.0
    %v105 = vld [vmem:[#allocation2] sm:$0x1]
    %v106 = vrot.slane %v104, 4
    %v107 = vadd.f32 %v104, %v106
    %v108 = vrot.slane %v107, 2
    %v109 = vadd.f32 %v107, %v108
    %v110 = vrot.slane %v109, 1
    %v111 = vadd.f32 %v109, %v110
    %v112 = vadd.f32 %v105, %v111
    %vm113 = vcmask 0
    %114 = vst.msk [vmem:[#allocation2] sm:$0x1] %vm113, %v112
    // Predicated region
    $region14: #{tpu_custom_call.1} parent=1 // pred_check
      _
    $region15: #{tpu_custom_call.1} parent=1 // pred_check_branch
      %116 = sbr.rel (0) target = $region17
    $region16: #{tpu_custom_call.1} parent=1 // pred_region
      %s118 = ssub.s32 16, 16
      %119 = vsyncadd [#allocation3], %s118
      %s121 = sshll.u32 [#allocation2], 4
      %s122 = int_to_ptr.vmem [resolvable:$true] %s121
      %124 = dma.vmem_to_hbm [thread:$0]  %s122, 16, %s2, [#allocation3]
    $region17: #{tpu_custom_call.1} parent=1 // pred_fallthru
      _
    // Predicated region
    $region18: #{tpu_custom_call.1} parent=1 // pred_check
      _
    $region19: #{tpu_custom_call.1} parent=1 // pred_check_branch
      %126 = sbr.rel (0) target = $region21
    $region20: #{tpu_custom_call.1} parent=1 // pred_region
      %127 = dma.done [#allocation3], 16
    $region21: #{tpu_custom_call.1} parent=1 // pred_fallthru
      _
    %128 = vsyncpa [#allocation3], 1

</llo_original>
